<compile_context>
chip_gen: v7x
topology: tpu7x:2x2x1
jax: 0.10.0
libtpu: 0.0.40
codegen_flags: <defaults>
</compile_context>

<pallas_src>
import functools

import jax
import jax.numpy as jnp
from jax.experimental import pallas as pl
from jax.experimental.pallas import tpu as pltpu

_BN_EPS = 1e-5
_LANE = 128


# ---------------------------------------------------------------------------
# Small helpers
# ---------------------------------------------------------------------------
def _round_up(x, m):
    return (x + m - 1) // m * m


def _choose_tile(total, pref):
    """Largest multiple of 128 <= pref that divides `total` (total % 128 == 0)."""
    t = max(_LANE, min(pref, total))
    t = (t // _LANE) * _LANE
    while total % t:
        t -= _LANE
    return t


@functools.lru_cache(maxsize=1)
def _vmem_budget_bytes():
    # 75% of physical VMEM: ~48 MiB on v7x (64 MiB), ~96 MiB on v5e/v6e (128 MiB).
    try:
        cap = int(pltpu.get_tpu_info().vmem_capacity_bytes)
    except Exception:
        cap = 64 * 1024 * 1024
    return max(int(0.75 * cap), 32 * 1024 * 1024)


def _vmem_limit(need_bytes):
    # 2x covers compiler scratch / alignment slop on top of the explicit buffers.
    return int(min(max(2 * need_bytes + (4 << 20), 32 << 20), _vmem_budget_bytes()))


def _pad_cout(c):
    # >128 channels -> multiple of 256 so tn >= 256 fills the v6e/v7x 2x256x256 MXU.
    return _LANE if c <= _LANE else _round_up(c, 256)


# ---------------------------------------------------------------------------
# Kernel 1: tiled matmul (conv via im2col) + per-M-tile per-channel sum / sumsq.
#   grid = (M tiles, Cout tiles); every output block written exactly once, so both
#   axes are "parallel" (megacore-safe).  Weights are a VMEM-resident (Kp, tn) slab;
#   there is no K grid axis and no accumulator scratch.
# ---------------------------------------------------------------------------
def _matmul_stats_kernel(p_ref, w_ref, y_ref, sum_ref, sq_ref):
    acc = jnp.dot(p_ref[...], w_ref[...], preferred_element_type=jnp.float32)
    y_ref[...] = acc.astype(y_ref.dtype)
    s = jnp.sum(acc, axis=0, keepdims=True)
    sum_ref[...] = s.reshape(sum_ref.shape)
    sq = jnp.sum(acc * acc, axis=0, keepdims=True)
    sq_ref[...] = sq.reshape(sq_ref.shape)


# ---------------------------------------------------------------------------
# Kernel 2: y * scale + shift (+ residual) (+ ReLU) with full-width lane-dense blocks.
#   grid = (M tiles,); rest = (out_ref,) or (res_ref, out_ref)
# ---------------------------------------------------------------------------
def _bn_finalize_kernel(y_ref, scale_ref, shift_ref, *rest, apply_relu):
    out_ref = rest[-1]
    res_ref = rest[0] if len(rest) == 2 else None
    out = y_ref[...].astype(jnp.float32) * scale_ref[...] + shift_ref[...]
    if res_ref is not None:
        out = out + res_ref[...].astype(jnp.float32)
    if apply_relu:
        out = jnp.maximum(out, 0.0)
    out_ref[...] = out.astype(out_ref.dtype)


# ---------------------------------------------------------------------------
# Fused conv(matmul) + BatchNorm(batch stats) + residual + ReLU wrapper
# ---------------------------------------------------------------------------
def conv_bn(patches, w_kc, gamma, beta, residual=None, apply_relu=False, tile_m=512):
    """patches: (M, K) bf16; w_kc: (Kp, Cp) bf16 pre-padded; gamma/beta: (1, Cp) f32;
    residual: (Mp, Cp) bf16 (already padded) or None.  Returns padded (Mp, Cp) bf16."""
    M, K = patches.shape
    Kp, Cp = w_kc.shape

    nm = max(1, -(-M // tile_m))
    tm = _round_up(-(-M // nm), 16)   # bf16 packs 2 rows / sublane -> 16-aligned tm
    Mp = nm * tm
    tn = _choose_tile(Cp, 512)
    nj = Cp // tn

    # Zero pad rows / K columns contribute nothing to the conv outputs or the stats;
    # the mean below uses the true element count M.
    p = jnp.pad(patches.astype(jnp.bfloat16), ((0, Mp - M), (0, Kp - K)))

    need_a = (2 * tm * Kp * 2      # patch double-buffer (bf16)
              + 2 * Kp * tn * 2    # resident weight slab (bf16, 2 buffers)
              + 2 * tm * tn * 2    # y output double-buffer (bf16)
              + 8 * tn * 4)        # per-tile stats blocks (f32)
    cost = pl.CostEstimate(
        flops=2 * Mp * Kp * Cp, transcendentals=0,
        bytes_accessed=Mp * Kp * 2 + nj * Kp * Cp * 2 + Mp * Cp * 2 + 2 * nm * Cp * 4)

    y, psum, psq = pl.pallas_call(
        _matmul_stats_kernel,
        grid=(nm, nj),
        in_specs=[
            pl.BlockSpec((tm, Kp), lambda i, j: (i, 0)),   # patches: streamed once
            pl.BlockSpec((Kp, tn), lambda i, j: (0, j)),   # weights: VMEM-resident slab
        ],
        out_specs=[
            pl.BlockSpec((tm, tn), lambda i, j: (i, j)),
            pl.BlockSpec((1, 1, tn), lambda i, j: (i, 0, j)),
            pl.BlockSpec((1, 1, tn), lambda i, j: (i, 0, j)),
        ],
        out_shape=[
            jax.ShapeDtypeStruct((Mp, Cp), jnp.bfloat16),
            jax.ShapeDtypeStruct((nm, 1, Cp), jnp.float32),
            jax.ShapeDtypeStruct((nm, 1, Cp), jnp.float32),
        ],
        compiler_params=pltpu.CompilerParams(
            dimension_semantics=("parallel", "parallel"),
            vmem_limit_bytes=_vmem_limit(need_a)),
        cost_estimate=cost,
    )(p, w_kc)

    # Tiny (nm x Cp) stats reduction + affine fold in plain JAX between the two calls.
    inv_count = 1.0 / float(M)
    mean = jnp.sum(psum, axis=(0, 1)) * inv_count
    var = jnp.maximum(jnp.sum(psq, axis=(0, 1)) * inv_count - mean * mean, 0.0)
    scale = gamma.reshape(-1) * jax.lax.rsqrt(var + _BN_EPS)
    shift = beta.reshape(-1) - mean * scale
    scale = scale.reshape(1, Cp)
    shift = shift.reshape(1, Cp)

    kernel = functools.partial(_bn_finalize_kernel, apply_relu=apply_relu)
    args = [y, scale, shift]
    in_specs = [
        pl.BlockSpec((tm, Cp), lambda i: (i, 0)),
        pl.BlockSpec((1, Cp), lambda i: (0, 0)),
        pl.BlockSpec((1, Cp), lambda i: (0, 0)),
    ]
    if residual is not None:
        rm, rc = residual.shape
        if (rm, rc) != (Mp, Cp):
            residual = jnp.pad(residual, ((0, Mp - rm), (0, Cp - rc)))
        args.append(residual.astype(jnp.bfloat16))
        in_specs.append(pl.BlockSpec((tm, Cp), lambda i: (i, 0)))

    n_big = len(args) - 2 + 1  # y (+ residual) + out, all (tm, Cp) bf16
    need_b = 2 * n_big * tm * Cp * 2 + 4 * Cp * 4 * 2
    out = pl.pallas_call(
        kernel,
        grid=(nm,),
        in_specs=in_specs,
        out_specs=pl.BlockSpec((tm, Cp), lambda i: (i, 0)),
        out_shape=jax.ShapeDtypeStruct((Mp, Cp), jnp.bfloat16),
        compiler_params=pltpu.CompilerParams(
            dimension_semantics=("parallel",),
            vmem_limit_bytes=_vmem_limit(need_b)),
    )(*args)
    return out   # padded (Mp, Cp); callers slice only where an image reshape is needed


# ---------------------------------------------------------------------------
# Plain-JAX glue: im2col patch extraction (pure slicing / stacking)
# ---------------------------------------------------------------------------
def _im2col(xpad, ho, wo, stride, dilation, ksize=3):
    n, _, _, cin = xpad.shape
    cols = []
    for kh in range(ksize):
        for kw in range(ksize):
            patch = jax.lax.slice(
                xpad,
                (0, kh * dilation, kw * dilation, 0),
                (n, kh * dilation + (ho - 1) * stride + 1,
                 kw * dilation + (wo - 1) * stride + 1, cin),
                (1, stride, stride, 1))
            cols.append(patch)
    return jnp.stack(cols, axis=-2).reshape(n * ho * wo, ksize * ksize * cin)


# ---------------------------------------------------------------------------
# One-time parameter preparation (layout + padding + bf16 cast, outside hot path)
# ---------------------------------------------------------------------------
def prepare_params(params):
    cout_p = _pad_cout(params["w1"].shape[0])

    def prep_w(w):                      # OIHW -> (Kp, Cp) padded, bf16
        o, i, kh, kw = w.shape
        k = i * kh * kw
        wm = jnp.transpose(w, (2, 3, 1, 0)).reshape(k, o)
        wm = jnp.pad(wm, ((0, _round_up(k, _LANE) - k), (0, cout_p - o)))
        return wm.astype(jnp.bfloat16)

    def prep_v(v):                      # (C,) -> (1, Cp) f32
        return jnp.pad(v, (0, cout_p - v.shape[0])).reshape(1, -1).astype(jnp.float32)

    prep = {
        "channels": params["w1"].shape[0],
        "w1": prep_w(params["w1"]), "g1": prep_v(params["g1"]), "b1": prep_v(params["b1"]),
        "w2": prep_w(params["w2"]), "g2": prep_v(params["g2"]), "b2": prep_v(params["b2"]),
    }
    if "wd" in params:
        prep["wd"] = prep_w(params["wd"])
        prep["gd"] = prep_v(params["gd"])
        prep["bd"] = prep_v(params["bd"])
    return prep


# ---------------------------------------------------------------------------
# BasicBlock forward built on the Pallas kernels
# ---------------------------------------------------------------------------
def basic_block_pallas(x_nchw, prep, stride, dilation, tile_m=512):
    x = jnp.transpose(x_nchw, (0, 2, 3, 1)).astype(jnp.bfloat16)   # NCHW -> NHWC bf16
    n, h, w, cin = x.shape
    chan = prep["channels"]
    ho = (h - 1) // stride + 1
    wo = (w - 1) // stride + 1
    M = n * ho * wo

    # conv1 (3x3, stride, dilation, pad=dilation) + bn1 + relu
    xpad = jnp.pad(x, ((0, 0), (dilation, dilation), (dilation, dilation), (0, 0)))
    p1 = _im2col(xpad, ho, wo, stride, dilation)
    out1_p = conv_bn(p1, prep["w1"], prep["g1"], prep["b1"],
                     apply_relu=True, tile_m=tile_m)
    Mp, Cp = out1_p.shape

    # shortcut branch — kept in padded (Mp, Cp) layout, fed straight into conv2's
    # finalize without a slice-then-repad round trip.
    if "wd" in prep:        # 1x1 conv, stride, + bn
        xs = x[:, ::stride, ::stride, :].reshape(M, cin)
        residual_p = conv_bn(xs, prep["wd"], prep["gd"], prep["bd"],
                             apply_relu=False, tile_m=tile_m)
    else:                   # identity (bf16), pad once into the block layout
        residual_p = jnp.pad(x.reshape(M, cin), ((0, Mp - M), (0, Cp - cin)))

    # conv2 (3x3, stride 1, dilation, pad=dilation) + bn2 + residual + relu
    out1_img = out1_p[:M, :chan].reshape(n, ho, wo, chan)
    o1pad = jnp.pad(out1_img, ((0, 0), (dilation, dilation),
                               (dilation, dilation), (0, 0)))
    p2 = _im2col(o1pad, ho, wo, 1, dilation)
    out2_p = conv_bn(p2, prep["w2"], prep["g2"], prep["b2"],
                     residual=residual_p, apply_relu=True, tile_m=tile_m)

    out = out2_p[:M, :chan].reshape(n, ho, wo, chan)
    return jnp.transpose(out, (0, 3, 1, 2)).astype(jnp.float32)     # NHWC -> NCHW


# ---------------------------------------------------------------------------
# Pure-JAX f32 reference (module semantics, for correctness check)
# ---------------------------------------------------------------------------
def basic_block_ref(x, params, stride, dilation):
    def conv(x, w, s, d, pad):
        return jax.lax.conv_general_dilated(
            x, w, (s, s), [(pad, pad), (pad, pad)], rhs_dilation=(d, d),
            dimension_numbers=("NCHW", "OIHW", "NCHW"))

    def bn(x, g, b):
        mean = jnp.mean(x, axis=(0, 2, 3), keepdims=True)
        var = jnp.mean((x - mean) ** 2, axis=(0, 2, 3), keepdims=True)
        return ((x - mean) * jax.lax.rsqrt(var + _BN_EPS)
                * g.reshape(1, -1, 1, 1) + b.reshape(1, -1, 1, 1))

    out = jax.nn.relu(bn(conv(x, params["w1"], stride, dilation, dilation),
                         params["g1"], params["b1"]))
    out = bn(conv(out, params["w2"], 1, dilation, dilation),
             params["g2"], params["b2"])
    if stride != 1 or x.shape[1] != params["w1"].shape[0]:
        res = bn(conv(x, params["wd"], stride, 1, 0), params["gd"], params["bd"])
    else:
        res = x
    return jax.nn.relu(out + res)


# ---------------------------------------------------------------------------
# Deterministic parameter construction (shapes dictated by BasicBlock.__init__)
# ---------------------------------------------------------------------------
def build_params(key, in_channels, channels, stride):
    out_channels = channels  # expansion = 1
    ks = jax.random.split(key, 8)
    params = {
        "w1": 0.1 * jax.random.normal(ks[0], (channels, in_channels, 3, 3), jnp.float32),
        "g1": 1.0 + 0.1 * jax.random.normal(ks[1], (channels,), jnp.float32),
        "b1": 0.1 * jax.random.normal(ks[2], (channels,), jnp.float32),
        "w2": 0.1 * jax.random.normal(ks[3], (channels, channels, 3, 3), jnp.float32),
        "g2": 1.0 + 0.1 * jax.random.normal(ks[4], (channels,), jnp.float32),
        "b2": 0.1 * jax.random.normal(ks[5], (channels,), jnp.float32),
    }
    if stride != 1 or in_channels != out_channels:
        params["wd"] = 0.1 * jax.random.normal(
            ks[6], (out_channels, in_channels, 1, 1), jnp.float32)
        kd1, kd2 = jax.random.split(ks[7])
        params["gd"] = 1.0 + 0.1 * jax.random.normal(kd1, (out_channels,), jnp.float32)
        params["bd"] = 0.1 * jax.random.normal(kd2, (out_channels,), jnp.float32)
    return params


if __name__ == "__main__":
    key = jax.random.PRNGKey(0)
    kx, kp1, kp2 = jax.random.split(key, 3)

    x = jax.random.normal(kx, (2, 4, 16, 16), jnp.float32)   # NCHW

    # Config A: channel expansion + stride 2 (exercises 1x1 downsample path and the
    # padded residual fed directly from the shortcut conv into conv2's finalize).
    params_a = build_params(kp1, in_channels=4, channels=8, stride=2)
    prep_a = prepare_params(params_a)
    out_a = jax.block_until_ready(basic_block_pallas(x, prep_a, stride=2, dilation=1))
    ref_a = basic_block_ref(x, params_a, stride=2, dilation=1)
    assert out_a.shape == (2, 8, 8, 8), out_a.shape
    assert jnp.allclose(out_a, ref_a, rtol=4e-2, atol=4e-2), (
        "config A mismatch: max err %f" % float(jnp.max(jnp.abs(out_a - ref_a))))

    # Config B: identity shortcut + dilation 2; small M tile so the grid has several
    # M steps and the per-M-tile BN partial-stats path is exercised.
    params_b = build_params(kp2, in_channels=4, channels=4, stride=1)
    prep_b = prepare_params(params_b)
    out_b = jax.block_until_ready(
        basic_block_pallas(x, prep_b, stride=1, dilation=2, tile_m=128))
    ref_b = basic_block_ref(x, params_b, stride=1, dilation=2)
    assert out_b.shape == (2, 4, 16, 16), out_b.shape
    assert jnp.allclose(out_b, ref_b, rtol=4e-2, atol=4e-2), (
        "config B mismatch: max err %f" % float(jnp.max(jnp.abs(out_b - ref_b))))

    print("KERNEL_OK")
</pallas_src>

<mosaic_0001>
module attributes {stable_mosaic.version = 11 : i64} {
  func.func @_matmul_stats_kernel(%arg0: i32, %arg1: i32, %arg2: memref<128x128xbf16, #tpu.memory_space<vmem>>, %arg3: memref<128x128xbf16, #tpu.memory_space<vmem>>, %arg4: memref<128x128xbf16, #tpu.memory_space<vmem>>, %arg5: memref<1x1x128xf32, #tpu.memory_space<vmem>>, %arg6: memref<1x1x128xf32, #tpu.memory_space<vmem>>) attributes {dimension_semantics = [#tpu.dimension_semantics<parallel>, #tpu.dimension_semantics<parallel>], iteration_bounds = array<i64: 1, 1>, scalar_prefetch = 0 : i64, scratch_operands = 0 : i64, tpu.core_type = #tpu.core_type<tc>, window_params = [{transform_indices = @transform_0, window_bounds = array<i64: 128, 128>}, {transform_indices = @transform_1, window_bounds = array<i64: 128, 128>}, {transform_indices = @transform_2, window_bounds = array<i64: 128, 128>}, {transform_indices = @transform_3, window_bounds = array<i64: 1, 1, 128>}, {transform_indices = @transform_4, window_bounds = array<i64: 1, 1, 128>}]} {
    %c0 = arith.constant 0 : index
    %c0_0 = arith.constant 0 : index
    %0 = vector.load %arg2[%c0, %c0_0] : memref<128x128xbf16, #tpu.memory_space<vmem>>, vector<128x128xbf16>
    %c0_1 = arith.constant 0 : index
    %c0_2 = arith.constant 0 : index
    %1 = vector.load %arg3[%c0_1, %c0_2] : memref<128x128xbf16, #tpu.memory_space<vmem>>, vector<128x128xbf16>
    %cst = arith.constant dense<0.000000e+00> : vector<128x128xf32>
    %2 = tpu.matmul %0, %1, %cst {dimension_numbers = #tpu.dot_dimension_numbers<[1], [0], [0], [1], [0, 0, 1, 1], [], []>} : vector<128x128xbf16>, vector<128x128xbf16>, vector<128x128xf32> -> vector<128x128xf32>
    %3 = arith.truncf %2 : vector<128x128xf32> to vector<128x128xbf16>
    %c0_3 = arith.constant 0 : index
    %c0_4 = arith.constant 0 : index
    %4 = vector.load %arg4[%c0_3, %c0_4] : memref<128x128xbf16, #tpu.memory_space<vmem>>, vector<128x128xbf16>
    tpu.vector_store %arg4[%c0_3, %c0_4], %3 {strides = array<i32>} : memref<128x128xbf16, #tpu.memory_space<vmem>>, vector<128x128xbf16>,
    %cst_5 = arith.constant dense<0.000000e+00> : vector<128xf32>
    %5 = vector.multi_reduction <add>, %2, %cst_5 [0] : vector<128x128xf32> to vector<128xf32>
    %6 = vector.shape_cast %5 : vector<128xf32> to vector<1x128xf32>
    %7 = vector.shape_cast %6 : vector<1x128xf32> to vector<1x1x128xf32>
    %c0_6 = arith.constant 0 : index
    %c0_7 = arith.constant 0 : index
    %c0_8 = arith.constant 0 : index
    %8 = vector.load %arg5[%c0_6, %c0_7, %c0_8] : memref<1x1x128xf32, #tpu.memory_space<vmem>>, vector<1x1x128xf32>
    tpu.vector_store %arg5[%c0_6, %c0_7, %c0_8], %7 {strides = array<i32>} : memref<1x1x128xf32, #tpu.memory_space<vmem>>, vector<1x1x128xf32>,
    %9 = arith.mulf %2, %2 : vector<128x128xf32>
    %cst_9 = arith.constant dense<0.000000e+00> : vector<128xf32>
    %10 = vector.multi_reduction <add>, %9, %cst_9 [0] : vector<128x128xf32> to vector<128xf32>
    %11 = vector.shape_cast %10 : vector<128xf32> to vector<1x128xf32>
    %12 = vector.shape_cast %11 : vector<1x128xf32> to vector<1x1x128xf32>
    %c0_10 = arith.constant 0 : index
    %c0_11 = arith.constant 0 : index
    %c0_12 = arith.constant 0 : index
    %13 = vector.load %arg6[%c0_10, %c0_11, %c0_12] : memref<1x1x128xf32, #tpu.memory_space<vmem>>, vector<1x1x128xf32>
    tpu.vector_store %arg6[%c0_10, %c0_11, %c0_12], %12 {strides = array<i32>} : memref<1x1x128xf32, #tpu.memory_space<vmem>>, vector<1x1x128xf32>,
    return
  }
  func.func @transform_0(%arg0: i32, %arg1: i32) -> (i32, i32) {
    %c0_i32 = arith.constant 0 : i32
    %c0_i32_0 = arith.constant 0 : i32
    return %arg0, %c0_i32 : i32, i32
  }
  func.func @transform_1(%arg0: i32, %arg1: i32) -> (i32, i32) {
    %c0_i32 = arith.constant 0 : i32
    %c0_i32_0 = arith.constant 0 : i32
    return %c0_i32, %arg1 : i32, i32
  }
  func.func @transform_2(%arg0: i32, %arg1: i32) -> (i32, i32) {
    %c0_i32 = arith.constant 0 : i32
    return %arg0, %arg1 : i32, i32
  }
  func.func @transform_3(%arg0: i32, %arg1: i32) -> (i32, i32, i32) {
    %c0_i32 = arith.constant 0 : i32
    %c0_i32_0 = arith.constant 0 : i32
    return %arg0, %c0_i32, %arg1 : i32, i32, i32
  }
  func.func @transform_4(%arg0: i32, %arg1: i32) -> (i32, i32, i32) {
    %c0_i32 = arith.constant 0 : i32
    %c0_i32_0 = arith.constant 0 : i32
    return %arg0, %c0_i32, %arg1 : i32, i32, i32
  }
}

</mosaic_0001>

<llo_original>
// kernel: tpu_custom_call.1
$region0: #{tpu_custom_call.1}
  #allocation0 [shape = 'u32[]', space=smem, size = 0x4, offset = 0x4, fixed_abs, tag = 'smem constant byte address 0x4 - core index']
  #allocation1 [shape = 'u32[144,128]{1,0:T(1,128)}', space=vmem, size = 0x12000, scoped, tag = 'internal scratch']
  %s0 = inlined_call_operand.hbm [shape: bf16[128,128], index: 0, kind: input, shape index: {}]
  %s1 = inlined_call_operand.hbm [shape: bf16[128,128], index: 1, kind: input, shape index: {}]
  %s2 = inlined_call_operand.hbm [shape: bf16[128,128], index: 2, kind: output, shape index: {0}]
  %s3 = inlined_call_operand.hbm [shape: f32[1,1,128], index: 3, kind: output, shape index: {1}]
  %s4 = inlined_call_operand.hbm [shape: f32[1,1,128], index: 4, kind: output, shape index: {2}]
  %5 = xla_tuple %s2, %s3, %s4
  %s6 = sld [smem:[#allocation0]]
  $region42: #{tpu_custom_call.1} parent=0
    _
  %s8 = ssub.s32 1, %s6
  %s9 = scalar_select 0, %s8, %s6
  $region1: #{tpu_custom_call.1} parent=0
    #allocation2 [shape = 'u8[32768]{0}', space=vmem, size = 0x8000, scoped, tag = 'input window, operand 0, single buffered']
    #allocation3 [shape = 's32[1]{0}', space=sflag, size = 0x4, scoped, tag = 'scoped memory for tpu_custom_call.1']
    #allocation4 [shape = 's32[1]{0}', space=sflag, size = 0x4, scoped, tag = 'scoped memory for tpu_custom_call.1']
    #allocation5 [shape = 'u8[32768]{0}', space=vmem, size = 0x8000, scoped, tag = 'input window, operand 1, single buffered']
    #allocation6 [shape = 's32[1]{0}', space=sflag, size = 0x4, scoped, tag = 'scoped memory for tpu_custom_call.1']
    #allocation7 [shape = 'u8[32768]{0}', space=vmem, size = 0x8000, scoped, tag = 'output window, operand 0, single buffered']
    #allocation8 [shape = 'u8[512]{0}', space=vmem, size = 0x400, scoped, tag = 'output window, operand 1, single buffered']
    #allocation9 [shape = 's32[1]{0}', space=sflag, size = 0x4, scoped, tag = 'scoped memory for tpu_custom_call.1']
    #allocation10 [shape = 'u8[512]{0}', space=vmem, size = 0x400, scoped, tag = 'output window, operand 2, single buffered']
    %10 = vsyncpa [#allocation3], 0
    %11 = vsyncpa [#allocation6], 0
    %12 = vsyncpa [#allocation4], 0
    %13 = vsyncpa [#allocation9], 0
    // Predicated region
    $region2: #{tpu_custom_call.1} parent=1 // pred_check
      _
    $region3: #{tpu_custom_call.1} parent=1 // pred_check_branch
      %15 = sbr.rel (0) target = $region5
    $region4: #{tpu_custom_call.1} parent=1 // pred_region
      %s17 = ssub.s32 1024, 1024
      %18 = vsyncadd [#allocation3], %s17
      %s19 = sshll.u32 [#allocation2], 4
      %s20 = int_to_ptr.vmem [resolvable:$true] %s19
      %25 = dma.hbm_to_vmem [thread:$0]  %s0, 1024, %s20, [#allocation3], 64, 64, 4
    $region5: #{tpu_custom_call.1} parent=1 // pred_fallthru
      _
    // Predicated region
    $region6: #{tpu_custom_call.1} parent=1 // pred_check
      _
    $region7: #{tpu_custom_call.1} parent=1 // pred_check_branch
      %27 = sbr.rel (0) target = $region9
    $region8: #{tpu_custom_call.1} parent=1 // pred_region
      %s29 = ssub.s32 1024, 1024
      %30 = vsyncadd [#allocation6], %s29
      %s31 = sshll.u32 [#allocation5], 4
      %s32 = int_to_ptr.vmem [resolvable:$true] %s31
      %37 = dma.hbm_to_vmem [thread:$0]  %s1, 1024, %s32, [#allocation6], 64, 64, 4
    $region9: #{tpu_custom_call.1} parent=1 // pred_fallthru
      _
    // Predicated region
    $region10: #{tpu_custom_call.1} parent=1 // pred_check
      _
    $region11: #{tpu_custom_call.1} parent=1 // pred_check_branch
      %39 = sbr.rel (0) target = $region13
    $region12: #{tpu_custom_call.1} parent=1 // pred_region
      %40 = dma.done [#allocation3], 1024
    $region13: #{tpu_custom_call.1} parent=1 // pred_fallthru
      _
    // Predicated region
    $region14: #{tpu_custom_call.1} parent=1 // pred_check
      _
    $region15: #{tpu_custom_call.1} parent=1 // pred_check_branch
      %42 = sbr.rel (0) target = $region17
    $region16: #{tpu_custom_call.1} parent=1 // pred_region
      %43 = dma.done [#allocation6], 1024
    $region17: #{tpu_custom_call.1} parent=1 // pred_fallthru
      _
    %v45 = vld [vmem:[#allocation2] sm:$0xf]
    %v46 = vld [vmem:[#allocation2 + $0x4] sm:$0xf]
    %v47 = vld [vmem:[#allocation2 + $0x8] sm:$0xf]
    %v48 = vld [vmem:[#allocation2 + $0xc] sm:$0xf]
    %v49 = vld [vmem:[#allocation2 + $0x10] sm:$0xf]
    %v50 = vld [vmem:[#allocation2 + $0x14] sm:$0xf]
    %v51 = vld [vmem:[#allocation2 + $0x18] sm:$0xf]
    %v52 = vld [vmem:[#allocation2 + $0x1c] sm:$0xf]
    %v53 = vld [vmem:[#allocation2 + $0x20] sm:$0xf]
    %v54 = vld [vmem:[#allocation2 + $0x24] sm:$0xf]
    %v55 = vld [vmem:[#allocation2 + $0x28] sm:$0xf]
    %v56 = vld [vmem:[#allocation2 + $0x2c] sm:$0xf]
    %v57 = vld [vmem:[#allocation2 + $0x30] sm:$0xf]
    %v58 = vld [vmem:[#allocation2 + $0x34] sm:$0xf]
    %v59 = vld [vmem:[#allocation2 + $0x38] sm:$0xf]
    %v60 = vld [vmem:[#allocation2 + $0x3c] sm:$0xf]
    %v61 = vld [vmem:[#allocation5] sm:$0xf]
    %v62 = vld [vmem:[#allocation5 + $0x4] sm:$0xf]
    %v63 = vld [vmem:[#allocation5 + $0x8] sm:$0xf]
    %v64 = vld [vmem:[#allocation5 + $0xc] sm:$0xf]
    %v65 = vld [vmem:[#allocation5 + $0x10] sm:$0xf]
    %v66 = vld [vmem:[#allocation5 + $0x14] sm:$0xf]
    %v67 = vld [vmem:[#allocation5 + $0x18] sm:$0xf]
    %v68 = vld [vmem:[#allocation5 + $0x1c] sm:$0xf]
    %v69 = vld [vmem:[#allocation5 + $0x20] sm:$0xf]
    %v70 = vld [vmem:[#allocation5 + $0x24] sm:$0xf]
    %v71 = vld [vmem:[#allocation5 + $0x28] sm:$0xf]
    %v72 = vld [vmem:[#allocation5 + $0x2c] sm:$0xf]
    %v73 = vld [vmem:[#allocation5 + $0x30] sm:$0xf]
    %v74 = vld [vmem:[#allocation5 + $0x34] sm:$0xf]
    %v75 = vld [vmem:[#allocation5 + $0x38] sm:$0xf]
    %v76 = vld [vmem:[#allocation5 + $0x3c] sm:$0xf]
    %v93 = vunpack.c.l.b16 %v45
    %v94 = vunpack.c.l.b16 %v46
    %v95 = vunpack.c.l.b16 %v47
    %v96 = vunpack.c.l.b16 %v48
    %v97 = vunpack.c.l.b16 %v49
    %v98 = vunpack.c.l.b16 %v50
    %v99 = vunpack.c.l.b16 %v51
    %v100 = vunpack.c.l.b16 %v52
    %v101 = vunpack.c.l.b16 %v53
    %v102 = vunpack.c.l.b16 %v54
    %v103 = vunpack.c.l.b16 %v55
    %v104 = vunpack.c.l.b16 %v56
    %v105 = vunpack.c.l.b16 %v57
    %v106 = vunpack.c.l.b16 %v58
    %v107 = vunpack.c.l.b16 %v59
    %v108 = vunpack.c.l.b16 %v60
    %v109 = vpack.c.b16 %v94, %v93
    %v110 = vpack.c.b16 %v96, %v95
    %v111 = vpack.c.b16 %v98, %v97
    %v112 = vpack.c.b16 %v100, %v99
    %v113 = vpack.c.b16 %v102, %v101
    %v114 = vpack.c.b16 %v104, %v103
    %v115 = vpack.c.b16 %v106, %v105
    %v116 = vpack.c.b16 %v108, %v107
    %v141 = vunpack.c.l.b16 %v61
    %v142 = vunpack.c.l.b16 %v62
    %v143 = vunpack.c.l.b16 %v63
    %v144 = vunpack.c.l.b16 %v64
    %v145 = vunpack.c.l.b16 %v65
    %v146 = vunpack.c.l.b16 %v66
    %v147 = vunpack.c.l.b16 %v67
    %v148 = vunpack.c.l.b16 %v68
    %v149 = vunpack.c.l.b16 %v69
    %v150 = vunpack.c.l.b16 %v70
    %v151 = vunpack.c.l.b16 %v71
    %v152 = vunpack.c.l.b16 %v72
    %v153 = vunpack.c.l.b16 %v73
    %v154 = vunpack.c.l.b16 %v74
    %v155 = vunpack.c.l.b16 %v75
    %v156 = vunpack.c.l.b16 %v76
    %v157 = vpack.c.b16 %v142, %v141
    %v158 = vpack.c.b16 %v144, %v143
    %v159 = vpack.c.b16 %v146, %v145
    %v160 = vpack.c.b16 %v148, %v147
    %v161 = vpack.c.b16 %v150, %v149
    %v162 = vpack.c.b16 %v152, %v151
    %v163 = vpack.c.b16 %v154, %v153
    %v164 = vpack.c.b16 %v156, %v155
    %173 = vmatprep.subr.bf16.mxu0 0
    %174 = vmatpush1.bf16.msra.mxu0 %v157
    %175 = vmatprep.subr.bf16.mxu0 0
    %176 = vmatpush1.bf16.msra.mxu0 %v158
    %177 = vmatprep.subr.bf16.mxu0 0
    %178 = vmatpush1.bf16.msra.mxu0 %v159
    %179 = vmatprep.subr.bf16.mxu0 0
    %180 = vmatpush1.bf16.msra.mxu0 %v160
    %181 = vmatprep.subr.bf16.mxu0 0
    %182 = vmatpush1.bf16.msra.mxu0 %v161
    %183 = vmatprep.subr.bf16.mxu0 0
    %184 = vmatpush1.bf16.msra.mxu0 %v162
    %185 = vmatprep.subr.bf16.mxu0 0
    %186 = vmatpush1.bf16.msra.mxu0 %v163
    %187 = vmatprep.subr.bf16.mxu0 0
    %188 = vmatpush1.bf16.msra.mxu0 %v164
    %189 = vmatprep.subr.bf16.mxu0 0
    %190 = vmatpush1.bf16.msra.mxu0 0
    %191 = vmatprep.subr.bf16.mxu0 0
    %192 = vmatpush1.bf16.msra.mxu0 0
    %193 = vmatprep.subr.bf16.mxu0 0
    %194 = vmatpush1.bf16.msra.mxu0 0
    %195 = vmatprep.subr.bf16.mxu0 0
    %196 = vmatpush1.bf16.msra.mxu0 0
    %197 = vmatprep.subr.bf16.mxu0 0
    %198 = vmatpush1.bf16.msra.mxu0 0
    %199 = vmatprep.subr.bf16.mxu0 0
    %200 = vmatpush1.bf16.msra.mxu0 0
    %201 = vmatprep.subr.bf16.mxu0 0
    %202 = vmatpush1.bf16.msra.mxu0 0
    %203 = vmatprep.subr.bf16.mxu0 0
    %204 = vmatpush1.bf16.msra.mxu0 0
    %205 = vmatprep.mubr.bf16.mxu0 0
    %206 = vmatmul.mubr.bf16.gmra.mrb[0].mxu0 %v109
    %v207 = vpop.f32.mrb[0].mxu0
    %v208 = vadd.f32 0.0, %v207
    %v209 = vpop.f32.mrb[0].mxu0
    %v210 = vpop.f32.mrb[0].mxu0
    %v211 = vadd.f32 0.0, %v210
    %v212 = vpop.f32.mrb[0].mxu0
    %213 = vmatprep.mubr.bf16.mxu0 0
    %214 = vmatmul.mubr.bf16.gmra.mrb[0].mxu0 %v110
    %v215 = vpop.f32.mrb[0].mxu0
    %v216 = vadd.f32 0.0, %v215
    %v217 = vpop.f32.mrb[0].mxu0
    %v218 = vpop.f32.mrb[0].mxu0
    %v219 = vadd.f32 0.0, %v218
    %v220 = vpop.f32.mrb[0].mxu0
    %221 = vmatprep.mubr.bf16.mxu0 0
    %222 = vmatmul.mubr.bf16.gmra.mrb[0].mxu0 %v111
    %v223 = vpop.f32.mrb[0].mxu0
    %v224 = vadd.f32 0.0, %v223
    %v225 = vpop.f32.mrb[0].mxu0
    %v226 = vpop.f32.mrb[0].mxu0
    %v227 = vadd.f32 0.0, %v226
    %v228 = vpop.f32.mrb[0].mxu0
    %229 = vmatprep.mubr.bf16.mxu0 0
    %230 = vmatmul.mubr.bf16.gmra.mrb[0].mxu0 %v112
    %v231 = vpop.f32.mrb[0].mxu0
    %v232 = vadd.f32 0.0, %v231
    %v233 = vpop.f32.mrb[0].mxu0
    %v234 = vpop.f32.mrb[0].mxu0
    %v235 = vadd.f32 0.0, %v234
    %v236 = vpop.f32.mrb[0].mxu0
    %237 = vmatprep.mubr.bf16.mxu0 0
    %238 = vmatmul.mubr.bf16.gmra.mrb[0].mxu0 %v113
    %v239 = vpop.f32.mrb[0].mxu0
    %v240 = vadd.f32 0.0, %v239
    %v241 = vpop.f32.mrb[0].mxu0
    %v242 = vpop.f32.mrb[0].mxu0
    %v243 = vadd.f32 0.0, %v242
    %v244 = vpop.f32.mrb[0].mxu0
    %245 = vmatprep.mubr.bf16.mxu0 0
    %246 = vmatmul.mubr.bf16.gmra.mrb[0].mxu0 %v114
    %v247 = vpop.f32.mrb[0].mxu0
    %v248 = vadd.f32 0.0, %v247
    %v249 = vpop.f32.mrb[0].mxu0
    %v250 = vpop.f32.mrb[0].mxu0
    %v251 = vadd.f32 0.0, %v250
    %v252 = vpop.f32.mrb[0].mxu0
    %253 = vmatprep.mubr.bf16.mxu0 0
    %254 = vmatmul.mubr.bf16.gmra.mrb[0].mxu0 %v115
    %v255 = vpop.f32.mrb[0].mxu0
    %v256 = vadd.f32 0.0, %v255
    %v257 = vpop.f32.mrb[0].mxu0
    %v258 = vpop.f32.mrb[0].mxu0
    %v259 = vadd.f32 0.0, %v258
    %v260 = vpop.f32.mrb[0].mxu0
    %261 = vmatprep.mubr.bf16.mxu0 0
    %262 = vmatmul.mubr.bf16.gmra.mrb[0].mxu0 %v116
    %v263 = vpop.f32.mrb[0].mxu0
    %v264 = vadd.f32 0.0, %v263
    %v265 = vpop.f32.mrb[0].mxu0
    %v266 = vpop.f32.mrb[0].mxu0
    %v267 = vadd.f32 0.0, %v266
    %v268 = vpop.f32.mrb[0].mxu0
    %269 = vdwg.mxu0
    %v270 = vpack.c.bf16 %v211, %v208
    %v271 = vpack.c.bf16 %v219, %v216
    %v272 = vpack.c.bf16 %v227, %v224
    %v273 = vpack.c.bf16 %v235, %v232
    %v274 = vpack.c.bf16 %v243, %v240
    %v275 = vpack.c.bf16 %v251, %v248
    %v276 = vpack.c.bf16 %v259, %v256
    %v277 = vpack.c.bf16 %v267, %v264
    %v286 = vunpack.c.l.b16 %v270
    %v287 = vunpack.c.h.b16 %v270
    %v288 = vunpack.c.l.b16 %v271
    %v289 = vunpack.c.h.b16 %v271
    %v290 = vunpack.c.l.b16 %v272
    %v291 = vunpack.c.h.b16 %v272
    %v292 = vunpack.c.l.b16 %v273
    %v293 = vunpack.c.h.b16 %v273
    %v294 = vunpack.c.l.b16 %v274
    %v295 = vunpack.c.h.b16 %v274
    %v296 = vunpack.c.l.b16 %v275
    %v297 = vunpack.c.h.b16 %v275
    %v298 = vunpack.c.l.b16 %v276
    %v299 = vunpack.c.h.b16 %v276
    %v300 = vunpack.c.l.b16 %v277
    %v301 = vunpack.c.h.b16 %v277
    %v302 = vpack.c.b16 %v286, %v286
    %v303 = vpack.c.b16 %v287, %v287
    %v304 = vpack.c.b16 %v288, %v288
    %v305 = vpack.c.b16 %v289, %v289
    %v306 = vpack.c.b16 %v290, %v290
    %v307 = vpack.c.b16 %v291, %v291
    %v308 = vpack.c.b16 %v292, %v292
    %v309 = vpack.c.b16 %v293, %v293
    %v310 = vpack.c.b16 %v294, %v294
    %v311 = vpack.c.b16 %v295, %v295
    %v312 = vpack.c.b16 %v296, %v296
    %v313 = vpack.c.b16 %v297, %v297
    %v314 = vpack.c.b16 %v298, %v298
    %v315 = vpack.c.b16 %v299, %v299
    %v316 = vpack.c.b16 %v300, %v300
    %v317 = vpack.c.b16 %v301, %v301
    %334 = vst [vmem:[#allocation7] sm:$0xf] %v302
    %335 = vst [vmem:[#allocation7 + $0x4] sm:$0xf] %v303
    %336 = vst [vmem:[#allocation7 + $0x8] sm:$0xf] %v304
    %337 = vst [vmem:[#allocation7 + $0xc] sm:$0xf] %v305
    %338 = vst [vmem:[#allocation7 + $0x10] sm:$0xf] %v306
    %339 = vst [vmem:[#allocation7 + $0x14] sm:$0xf] %v307
    %340 = vst [vmem:[#allocation7 + $0x18] sm:$0xf] %v308
    %341 = vst [vmem:[#allocation7 + $0x1c] sm:$0xf] %v309
    %342 = vst [vmem:[#allocation7 + $0x20] sm:$0xf] %v310
    %343 = vst [vmem:[#allocation7 + $0x24] sm:$0xf] %v311
    %344 = vst [vmem:[#allocation7 + $0x28] sm:$0xf] %v312
    %345 = vst [vmem:[#allocation7 + $0x2c] sm:$0xf] %v313
    %346 = vst [vmem:[#allocation7 + $0x30] sm:$0xf] %v314
    %347 = vst [vmem:[#allocation7 + $0x34] sm:$0xf] %v315
    %348 = vst [vmem:[#allocation7 + $0x38] sm:$0xf] %v316
    %349 = vst [vmem:[#allocation7 + $0x3c] sm:$0xf] %v317
    %v350 = vadd.f32 %v208, %v211
    %v351 = vadd.f32 %v350, %v216
    %v352 = vadd.f32 %v351, %v219
    %v353 = vadd.f32 %v352, %v224
    %v354 = vadd.f32 %v353, %v227
    %v355 = vadd.f32 %v354, %v232
    %v356 = vadd.f32 %v355, %v235
    %v357 = vadd.f32 %v356, %v240
    %v358 = vadd.f32 %v357, %v243
    %v359 = vadd.f32 %v358, %v248
    %v360 = vadd.f32 %v359, %v251
    %v361 = vadd.f32 %v360, %v256
    %v362 = vadd.f32 %v361, %v259
    %v363 = vadd.f32 %v362, %v264
    %v364 = vadd.f32 %v363, %v267
    %v365 = vrot.slane %v364, 4
    %v366 = vadd.f32 %v364, %v365
    %v367 = vrot.slane %v366, 2
    %v368 = vadd.f32 %v366, %v367
    %v369 = vrot.slane %v368, 1
    %v370 = vadd.f32 %v368, %v369
    %371 = vst [vmem:[#allocation8] sm:$0x1] %v370
    %v372 = vmul.f32 %v208, %v208
    %v373 = vmul.f32 %v211, %v211
    %v374 = vmul.f32 %v216, %v216
    %v375 = vmul.f32 %v219, %v219
    %v376 = vmul.f32 %v224, %v224
    %v377 = vmul.f32 %v227, %v227
    %v378 = vmul.f32 %v232, %v232
    %v379 = vmul.f32 %v235, %v235
    %v380 = vmul.f32 %v240, %v240
    %v381 = vmul.f32 %v243, %v243
    %v382 = vmul.f32 %v248, %v248
    %v383 = vmul.f32 %v251, %v251
    %v384 = vmul.f32 %v256, %v256
    %v385 = vmul.f32 %v259, %v259
    %v386 = vmul.f32 %v264, %v264
    %v387 = vmul.f32 %v267, %v267
    %v388 = vadd.f32 %v372, %v373
    %v389 = vadd.f32 %v388, %v374
    %v390 = vadd.f32 %v389, %v375
    %v391 = vadd.f32 %v390, %v376
    %v392 = vadd.f32 %v391, %v377
    %v393 = vadd.f32 %v392, %v378
    %v394 = vadd.f32 %v393, %v379
    %v395 = vadd.f32 %v394, %v380
    %v396 = vadd.f32 %v395, %v381
    %v397 = vadd.f32 %v396, %v382
    %v398 = vadd.f32 %v397, %v383
    %v399 = vadd.f32 %v398, %v384
    %v400 = vadd.f32 %v399, %v385
    %v401 = vadd.f32 %v400, %v386
    %v402 = vadd.f32 %v401, %v387
    %v403 = vrot.slane %v402, 4
    %v404 = vadd.f32 %v402, %v403
    %v405 = vrot.slane %v404, 2
    %v406 = vadd.f32 %v404, %v405
    %v407 = vrot.slane %v406, 1
    %v408 = vadd.f32 %v406, %v407
    %409 = vst [vmem:[#allocation10] sm:$0x1] %v408
    // Predicated region
    $region18: #{tpu_custom_call.1} parent=1 // pred_check
      _
    $region19: #{tpu_custom_call.1} parent=1 // pred_check_branch
      %411 = sbr.rel (0) target = $region21
    $region20: #{tpu_custom_call.1} parent=1 // pred_region
      %s413 = ssub.s32 1024, 1024
      %414 = vsyncadd [#allocation4], %s413
      %s415 = sshll.u32 [#allocation7], 4
      %s416 = int_to_ptr.vmem [resolvable:$true] %s415
      %421 = dma.vmem_to_hbm [thread:$0]  %s416, 1024, %s2, [#allocation4], 64, 64, 4
    $region21: #{tpu_custom_call.1} parent=1 // pred_fallthru
      _
    // Predicated region
    $region22: #{tpu_custom_call.1} parent=1 // pred_check
      _
    $region23: #{tpu_custom_call.1} parent=1 // pred_check_branch
      %423 = sbr.rel (0) target = $region25
    $region24: #{tpu_custom_call.1} parent=1 // pred_region
      %s425 = ssub.s32 16, 16
      %426 = vsyncadd [#allocation9], %s425
      %s428 = sshll.u32 [#allocation8], 4
      %s429 = int_to_ptr.vmem [resolvable:$true] %s428
      %431 = dma.vmem_to_hbm [thread:$0]  %s429, 16, %s3, [#allocation9]
    $region25: #{tpu_custom_call.1} parent=1 // pred_fallthru
      _
    // Predicated region
    $region26: #{tpu_custom_call.1} parent=1 // pred_check
      _
    $region27: #{tpu_custom_call.1} parent=1 // pred_check_branch
      %433 = sbr.rel (0) target = $region29
    $region28: #{tpu_custom_call.1} parent=1 // pred_region
      %s435 = ssub.s32 16, 16
      %436 = vsyncadd [#allocation9], %s435
      %s438 = sshll.u32 [#allocation10], 4
      %s439 = int_to_ptr.vmem [resolvable:$true] %s438
      %441 = dma.vmem_to_hbm [thread:$0]  %s439, 16, %s4, [#allocation9]
    $region29: #{tpu_custom_call.1} parent=1 // pred_fallthru
      _
    // Predicated region
    $region30: #{tpu_custom_call.1} parent=1 // pred_check
      _
    $region31: #{tpu_custom_call.1} parent=1 // pred_check_branch
      %443 = sbr.rel (0) target = $region33
    $region32: #{tpu_custom_call.1} parent=1 // pred_region
      %444 = dma.done [#allocation4], 1024
    $region33: #{tpu_custom_call.1} parent=1 // pred_fallthru
      _
    // Predicated region
    $region34: #{tpu_custom_call.1} parent=1 // pred_check
      _
    $region35: #{tpu_custom_call.1} parent=1 // pred_check_branch
      %446 = sbr.rel (0) target = $region37
    $region36: #{tpu_custom_call.1} parent=1 // pred_region
      %447 = dma.done [#allocation9], 16
    $region37: #{tpu_custom_call.1} parent=1 // pred_fallthru
      _
    // Predicated region
    $region38: #{tpu_custom_call.1} parent=1 // pred_check
      _
    $region39: #{tpu_custom_call.1} parent=1 // pred_check_branch
      %449 = sbr.rel (0) target = $region41
    $region40: #{tpu_custom_call.1} parent=1 // pred_region
      %450 = dma.done [#allocation9], 16
    $region41: #{tpu_custom_call.1} parent=1 // pred_fallthru
      _
    %451 = vsyncpa [#allocation3], 1
    %452 = vsyncpa [#allocation6], 1
    %453 = vsyncpa [#allocation4], 1
    %454 = vsyncpa [#allocation9], 1

</llo_original>
